<compile_context>
chip_gen: v5e
topology: v5e:2x2
jax: 0.10.0
libtpu: 0.0.40
codegen_flags: <defaults>
</compile_context>

<pallas_src>
import functools

import numpy as np
import jax
import jax.numpy as jnp
from jax.experimental import pallas as pl
from jax.experimental.pallas import tpu as pltpu

_LANE = 128          # lane width: padded N (output) dim of every layer
_SUBLANE_BF16 = 16   # bf16 sublane packing: padded K (contraction) dim
_SUBLANE = 8         # f32 sublane: batch padding


def _round_up(n, m):
    return ((n + m - 1) // m) * m


# ----------------------------------------------------------------------------
# Fused kernel: the whole forward is a single chain of `n_layers` linear+ReLU
# steps over one stacked weight/bias tensor (encoder layers first, then the
# view-merged decoder layers).
#   x_ref    : (Bp, Kp)     f32   input (batch padded to 8, K padded to Kp)
#   w_ref    : (L, Kp, Np)  bf16  stacked, zero-padded, pre-transposed weights
#   b_ref    : (L, 1, Np)   f32   stacked, zero-padded biases
#   z_ref    : (Bp, Np)     f32   encoder output (bottleneck), lane-dense
#   xhat_ref : (Bp, Np)     f32   all views' reconstructions, concatenated
# ----------------------------------------------------------------------------
def _fused_forward_kernel(n_enc, n_layers, x_ref, w_ref, b_ref, z_ref, xhat_ref):
    kp = w_ref.shape[1]
    h = x_ref[...].astype(jnp.float32)
    for l in range(n_layers):                       # static unroll over layers
        # Static contraction width; >= actual K of this layer.  Zero-padded
        # weight rows / activation columns make the truncation exact.
        kw = min(kp, h.shape[1])
        w = w_ref[l] if kw == kp else w_ref[l, :kw, :]
        acc = jnp.dot(h[:, :kw].astype(jnp.bfloat16), w,
                      preferred_element_type=jnp.float32)   # bf16 MXU, f32 acc
        h = jnp.maximum(acc + b_ref[l], 0.0)                 # f32 epilogue
        if l == n_enc - 1:
            z_ref[...] = h.astype(z_ref.dtype)
    xhat_ref[...] = h.astype(xhat_ref.dtype)


# ----------------------------------------------------------------------------
# Parameter construction.  Weights are stored PRE-TRANSPOSED: w has shape
# (in_dim, out_dim), so the forward is  relu(x @ w + b)  (== nn.Linear).
# ----------------------------------------------------------------------------
def _init_linear(key, in_dim, out_dim, dtype=jnp.float32):
    kw, kb = jax.random.split(key)
    bound = 1.0 / jnp.sqrt(jnp.array(in_dim, dtype))
    w = jax.random.uniform(kw, (in_dim, out_dim), dtype, -bound, bound)
    b = jax.random.uniform(kb, (out_dim,), dtype, -bound, bound)
    return w, b


def init_deep_mvnmf_params(key, input_dims, en_hidden_dims, num_views):
    params = {"encoder": [], "mv_decoder": []}
    for i in range(len(en_hidden_dims) - 1):
        key, sub = jax.random.split(key)
        params["encoder"].append(
            _init_linear(sub, en_hidden_dims[i], en_hidden_dims[i + 1]))
    for v in range(num_views):
        de_hidden_dims = [input_dims[v]]
        for k in range(1, len(en_hidden_dims)):
            de_hidden_dims.insert(0, en_hidden_dims[k])
        dec = []
        for j in range(len(de_hidden_dims) - 1):
            key, sub = jax.random.split(key)
            dec.append(_init_linear(sub, de_hidden_dims[j], de_hidden_dims[j + 1]))
        params["mv_decoder"].append(dec)
    return params


def prepare_params(params):
    """One-time layout: merge decoder views per depth, pad (K->16, N->128),
    stack all layers into one bf16 weight tensor and one f32 bias tensor."""
    enc = params["encoder"]
    dec = params["mv_decoder"]
    num_views = len(dec)
    depth = len(dec[0]) if num_views else 0

    layers = [(np.asarray(w, np.float32), np.asarray(b, np.float32))
              for (w, b) in enc]

    # Merge the V decoders depth-by-depth (they share every shape except the
    # final output width).
    for j in range(depth):
        ws = [np.asarray(dec[v][j][0], np.float32) for v in range(num_views)]
        bs = [np.asarray(dec[v][j][1], np.float32) for v in range(num_views)]
        if j == 0:
            w_m = np.concatenate(ws, axis=1)           # shared z input
        else:
            k_j = ws[0].shape[0]
            n_tot = sum(w.shape[1] for w in ws)
            w_m = np.zeros((num_views * k_j, n_tot), np.float32)
            col = 0
            for v in range(num_views):                 # block-diagonal
                n_v = ws[v].shape[1]
                w_m[v * k_j:(v + 1) * k_j, col:col + n_v] = ws[v]
                col += n_v
        layers.append((w_m, np.concatenate(bs, axis=0)))

    # Column spans of each view inside the final merged layer's output.
    view_spans, off = [], 0
    for v in range(num_views):
        n_v = np.asarray(dec[v][-1][0]).shape[1]
        view_spans.append((off, n_v))
        off += n_v

    kdims = [w.shape[0] for (w, _) in layers]
    ndims = [w.shape[1] for (w, _) in layers]
    num_layers = len(layers)
    kp = _round_up(max(kdims), _SUBLANE_BF16)
    npad = _round_up(max(ndims), _LANE)

    w_stack = np.zeros((num_layers, kp, npad), np.float32)
    b_stack = np.zeros((num_layers, 1, npad), np.float32)
    for l, (w, b) in enumerate(layers):
        w_stack[l, :w.shape[0], :w.shape[1]] = w
        b_stack[l, 0, :b.shape[0]] = b

    return {
        "w": jnp.asarray(w_stack, dtype=jnp.bfloat16),  # bf16 MXU operands
        "b": jnp.asarray(b_stack, dtype=jnp.float32),   # f32 epilogue
        "n_enc": len(enc),
        "n_layers": num_layers,
        "kp": kp,
        "np": npad,
        "z_dim": int(enc[-1][0].shape[1]),
        "view_spans": view_spans,
    }


# ----------------------------------------------------------------------------
# Forward pass (mirrors DeepMvNMF.forward) — one pallas_call, empty grid.
# ----------------------------------------------------------------------------
def deep_mvnmf_forward(prepared, x):
    B, k0 = x.shape
    Bp = _round_up(B, _SUBLANE)
    kp, npad = prepared["kp"], prepared["np"]
    assert k0 <= kp
    xp = jnp.zeros((Bp, kp), x.dtype).at[:B, :k0].set(x)

    kernel = functools.partial(_fused_forward_kernel,
                               prepared["n_enc"], prepared["n_layers"])
    vmem = pl.BlockSpec(memory_space=pltpu.MemorySpace.VMEM)

    z_out, xhat_out = pl.pallas_call(
        kernel,
        out_shape=(jax.ShapeDtypeStruct((Bp, npad), x.dtype),
                   jax.ShapeDtypeStruct((Bp, npad), x.dtype)),
        in_specs=[vmem, vmem, vmem],
        out_specs=(vmem, vmem),
        compiler_params=pltpu.CompilerParams(vmem_limit_bytes=32 * 1024 * 1024),
    )(xp, prepared["w"], prepared["b"])

    z = z_out[:B, :prepared["z_dim"]]
    x_hat_list = [xhat_out[:B, off:off + n] for (off, n) in prepared["view_spans"]]
    return z, x_hat_list


# Pure-JAX f32 reference (weights stored (in, out), so z @ w + b).
def _forward_ref(params, x):
    z = x
    for (w, b) in params["encoder"]:
        z = jnp.maximum(z @ w + b, 0.0)
    x_hat_list = []
    for dec in params["mv_decoder"]:
        x_hat = z
        for (w, b) in dec:
            x_hat = jnp.maximum(x_hat @ w + b, 0.0)
        x_hat_list.append(x_hat)
    return z, x_hat_list


if __name__ == "__main__":
    # Shapes consistent with the module:
    #   input x : (batch=8, en_hidden_dims[0]=32)
    #   encoder : 32 -> 16 -> 8
    #   decoders: view0: 8 -> 16 -> 48 ; view1: 8 -> 16 -> 40
    en_hidden_dims = [32, 16, 8]
    input_dims = [48, 40]
    num_views = len(input_dims)
    batch = 8

    key = jax.random.PRNGKey(0)
    kx, kparam = jax.random.split(key)
    x = jax.random.uniform(kx, (batch, en_hidden_dims[0]), jnp.float32)
    params = init_deep_mvnmf_params(kparam, input_dims, en_hidden_dims, num_views)
    prepared = prepare_params(params)   # merge/pad/stack once, outside forward

    z, x_hat_list = deep_mvnmf_forward(prepared, x)
    jax.block_until_ready(z)
    for xh in x_hat_list:
        jax.block_until_ready(xh)

    # Verify against the pure-JAX f32 reference.  Tolerance loosened because
    # MXU operands are bf16 (accumulation stays f32).
    z_ref, x_hat_ref = _forward_ref(params, x)
    assert z.shape == (batch, en_hidden_dims[-1])
    assert jnp.allclose(z, z_ref, atol=2e-2, rtol=2e-2)
    for v in range(num_views):
        assert x_hat_list[v].shape == (batch, input_dims[v])
        assert jnp.allclose(x_hat_list[v], x_hat_ref[v], atol=2e-2, rtol=2e-2)

    print("KERNEL_OK")
</pallas_src>

<mosaic_0001>
module attributes {stable_mosaic.version = 11 : i64} {
  func.func @_fused_forward_kernel(%arg0: memref<8x32xf32, #tpu.memory_space<vmem>>, %arg1: memref<4x32x128xbf16, #tpu.memory_space<vmem>>, %arg2: memref<4x1x128xf32, #tpu.memory_space<vmem>>, %arg3: memref<8x128xf32, #tpu.memory_space<vmem>>, %arg4: memref<8x128xf32, #tpu.memory_space<vmem>>) attributes {dimension_semantics = [], scalar_prefetch = 0 : i64, scratch_operands = 0 : i64, tpu.core_type = #tpu.core_type<tc>} {
    %c0 = arith.constant 0 : index
    %c0_0 = arith.constant 0 : index
    %0 = vector.load %arg0[%c0, %c0_0] : memref<8x32xf32, #tpu.memory_space<vmem>>, vector<8x32xf32>
    %c0_1 = arith.constant 0 : index
    %c0_2 = arith.constant 0 : index
    %c0_3 = arith.constant 0 : index
    %1 = vector.load %arg1[%c0_1, %c0_2, %c0_3] : memref<4x32x128xbf16, #tpu.memory_space<vmem>>, vector<1x32x128xbf16>
    %2 = vector.shape_cast %1 : vector<1x32x128xbf16> to vector<32x128xbf16>
    %3 = arith.truncf %0 : vector<8x32xf32> to vector<8x32xbf16>
    %cst = arith.constant dense<0.000000e+00> : vector<8x128xf32>
    %4 = tpu.matmul %3, %2, %cst {dimension_numbers = #tpu.dot_dimension_numbers<[1], [0], [0], [1], [0, 0, 1, 1], [], []>} : vector<8x32xbf16>, vector<32x128xbf16>, vector<8x128xf32> -> vector<8x128xf32>
    %c0_4 = arith.constant 0 : index
    %c0_5 = arith.constant 0 : index
    %c0_6 = arith.constant 0 : index
    %5 = vector.load %arg2[%c0_4, %c0_5, %c0_6] : memref<4x1x128xf32, #tpu.memory_space<vmem>>, vector<1x1x128xf32>
    %6 = vector.shape_cast %5 : vector<1x1x128xf32> to vector<1x128xf32>
    %7 = vector.broadcast %6 : vector<1x128xf32> to vector<8x128xf32>
    %8 = arith.addf %4, %7 : vector<8x128xf32>
    %cst_7 = arith.constant 0.000000e+00 : f32
    %9 = vector.broadcast %cst_7 : f32 to vector<8x128xf32>
    %10 = arith.maximumf %8, %9 : vector<8x128xf32>
    %c1 = arith.constant 1 : index
    %c0_8 = arith.constant 0 : index
    %c0_9 = arith.constant 0 : index
    %11 = vector.load %arg1[%c1, %c0_8, %c0_9] : memref<4x32x128xbf16, #tpu.memory_space<vmem>>, vector<1x32x128xbf16>
    %12 = vector.shape_cast %11 : vector<1x32x128xbf16> to vector<32x128xbf16>
    %13 = vector.extract_strided_slice %10 {offsets = [0, 0], sizes = [8, 32], strides = [1, 1]} : vector<8x128xf32> to vector<8x32xf32>
    %14 = arith.truncf %13 : vector<8x32xf32> to vector<8x32xbf16>
    %cst_10 = arith.constant dense<0.000000e+00> : vector<8x128xf32>
    %15 = tpu.matmul %14, %12, %cst_10 {dimension_numbers = #tpu.dot_dimension_numbers<[1], [0], [0], [1], [0, 0, 1, 1], [], []>} : vector<8x32xbf16>, vector<32x128xbf16>, vector<8x128xf32> -> vector<8x128xf32>
    %c1_11 = arith.constant 1 : index
    %c0_12 = arith.constant 0 : index
    %c0_13 = arith.constant 0 : index
    %16 = vector.load %arg2[%c1_11, %c0_12, %c0_13] : memref<4x1x128xf32, #tpu.memory_space<vmem>>, vector<1x1x128xf32>
    %17 = vector.shape_cast %16 : vector<1x1x128xf32> to vector<1x128xf32>
    %18 = vector.broadcast %17 : vector<1x128xf32> to vector<8x128xf32>
    %19 = arith.addf %15, %18 : vector<8x128xf32>
    %cst_14 = arith.constant 0.000000e+00 : f32
    %20 = vector.broadcast %cst_14 : f32 to vector<8x128xf32>
    %21 = arith.maximumf %19, %20 : vector<8x128xf32>
    %c0_15 = arith.constant 0 : index
    %c0_16 = arith.constant 0 : index
    %22 = vector.load %arg3[%c0_15, %c0_16] : memref<8x128xf32, #tpu.memory_space<vmem>>, vector<8x128xf32>
    tpu.vector_store %arg3[%c0_15, %c0_16], %21 {strides = array<i32>} : memref<8x128xf32, #tpu.memory_space<vmem>>, vector<8x128xf32>,
    %c2 = arith.constant 2 : index
    %c0_17 = arith.constant 0 : index
    %c0_18 = arith.constant 0 : index
    %23 = vector.load %arg1[%c2, %c0_17, %c0_18] : memref<4x32x128xbf16, #tpu.memory_space<vmem>>, vector<1x32x128xbf16>
    %24 = vector.shape_cast %23 : vector<1x32x128xbf16> to vector<32x128xbf16>
    %25 = vector.extract_strided_slice %21 {offsets = [0, 0], sizes = [8, 32], strides = [1, 1]} : vector<8x128xf32> to vector<8x32xf32>
    %26 = arith.truncf %25 : vector<8x32xf32> to vector<8x32xbf16>
    %cst_19 = arith.constant dense<0.000000e+00> : vector<8x128xf32>
    %27 = tpu.matmul %26, %24, %cst_19 {dimension_numbers = #tpu.dot_dimension_numbers<[1], [0], [0], [1], [0, 0, 1, 1], [], []>} : vector<8x32xbf16>, vector<32x128xbf16>, vector<8x128xf32> -> vector<8x128xf32>
    %c2_20 = arith.constant 2 : index
    %c0_21 = arith.constant 0 : index
    %c0_22 = arith.constant 0 : index
    %28 = vector.load %arg2[%c2_20, %c0_21, %c0_22] : memref<4x1x128xf32, #tpu.memory_space<vmem>>, vector<1x1x128xf32>
    %29 = vector.shape_cast %28 : vector<1x1x128xf32> to vector<1x128xf32>
    %30 = vector.broadcast %29 : vector<1x128xf32> to vector<8x128xf32>
    %31 = arith.addf %27, %30 : vector<8x128xf32>
    %cst_23 = arith.constant 0.000000e+00 : f32
    %32 = vector.broadcast %cst_23 : f32 to vector<8x128xf32>
    %33 = arith.maximumf %31, %32 : vector<8x128xf32>
    %c3 = arith.constant 3 : index
    %c0_24 = arith.constant 0 : index
    %c0_25 = arith.constant 0 : index
    %34 = vector.load %arg1[%c3, %c0_24, %c0_25] : memref<4x32x128xbf16, #tpu.memory_space<vmem>>, vector<1x32x128xbf16>
    %35 = vector.shape_cast %34 : vector<1x32x128xbf16> to vector<32x128xbf16>
    %36 = vector.extract_strided_slice %33 {offsets = [0, 0], sizes = [8, 32], strides = [1, 1]} : vector<8x128xf32> to vector<8x32xf32>
    %37 = arith.truncf %36 : vector<8x32xf32> to vector<8x32xbf16>
    %cst_26 = arith.constant dense<0.000000e+00> : vector<8x128xf32>
    %38 = tpu.matmul %37, %35, %cst_26 {dimension_numbers = #tpu.dot_dimension_numbers<[1], [0], [0], [1], [0, 0, 1, 1], [], []>} : vector<8x32xbf16>, vector<32x128xbf16>, vector<8x128xf32> -> vector<8x128xf32>
    %c3_27 = arith.constant 3 : index
    %c0_28 = arith.constant 0 : index
    %c0_29 = arith.constant 0 : index
    %39 = vector.load %arg2[%c3_27, %c0_28, %c0_29] : memref<4x1x128xf32, #tpu.memory_space<vmem>>, vector<1x1x128xf32>
    %40 = vector.shape_cast %39 : vector<1x1x128xf32> to vector<1x128xf32>
    %41 = vector.broadcast %40 : vector<1x128xf32> to vector<8x128xf32>
    %42 = arith.addf %38, %41 : vector<8x128xf32>
    %cst_30 = arith.constant 0.000000e+00 : f32
    %43 = vector.broadcast %cst_30 : f32 to vector<8x128xf32>
    %44 = arith.maximumf %42, %43 : vector<8x128xf32>
    %c0_31 = arith.constant 0 : index
    %c0_32 = arith.constant 0 : index
    %45 = vector.load %arg4[%c0_31, %c0_32] : memref<8x128xf32, #tpu.memory_space<vmem>>, vector<8x128xf32>
    tpu.vector_store %arg4[%c0_31, %c0_32], %44 {strides = array<i32>} : memref<8x128xf32, #tpu.memory_space<vmem>>, vector<8x128xf32>,
    return
  }
}

</mosaic_0001>

<llo_original>
// kernel: tpu_custom_call.1
$region0: #{tpu_custom_call.1}
  #allocation0 [shape = 'u32[]', space=smem, size = 0x4, offset = 0x4, fixed_abs, tag = 'smem constant byte address 0x4 - core index']
  #allocation1 [shape = 'u32[72,128]{1,0:T(1,128)}', space=vmem, size = 0x9000, scoped, tag = 'internal scratch']
  %s0 = inlined_call_operand.hbm [shape: f32[8,32], index: 0, kind: input, shape index: {}]
  %s1 = inlined_call_operand.hbm [shape: bf16[4,32,128], index: 1, kind: input, shape index: {}]
  %s2 = inlined_call_operand.hbm [shape: f32[4,1,128], index: 2, kind: input, shape index: {}]
  %s3 = inlined_call_operand.hbm [shape: f32[8,128], index: 3, kind: output, shape index: {0}]
  %s4 = inlined_call_operand.hbm [shape: f32[8,128], index: 4, kind: output, shape index: {1}]
  %5 = xla_tuple %s3, %s4
  %s6 = sld [smem:[#allocation0]]
  $region42: #{tpu_custom_call.1} parent=0
    _
  %s8 = ssub.s32 1, %s6
  %s9 = scalar_select 0, %s8, %s6
  $region1: #{tpu_custom_call.1} parent=0
    #allocation2 [shape = 'u8[4096]{0}', space=vmem, size = 0x1000, scoped, tag = 'input window, operand 0, single buffered']
    #allocation3 [shape = 's32[1]{0}', space=sflag, size = 0x4, scoped, tag = 'scoped memory for tpu_custom_call.1']
    #allocation4 [shape = 's32[1]{0}', space=sflag, size = 0x4, scoped, tag = 'scoped memory for tpu_custom_call.1']
    #allocation5 [shape = 'u8[32768]{0}', space=vmem, size = 0x8000, scoped, tag = 'input window, operand 1, single buffered']
    #allocation6 [shape = 's32[1]{0}', space=sflag, size = 0x4, scoped, tag = 'scoped memory for tpu_custom_call.1']
    #allocation7 [shape = 'u8[2048]{0}', space=vmem, size = 0x800, scoped, tag = 'input window, operand 2, single buffered']
    #allocation8 [shape = 'u8[4096]{0}', space=vmem, size = 0x1000, scoped, tag = 'output window, operand 0, single buffered']
    #allocation9 [shape = 'u8[4096]{0}', space=vmem, size = 0x1000, scoped, tag = 'output window, operand 1, single buffered']
    #allocation10 [shape = 's32[1]{0}', space=sflag, size = 0x4, scoped, tag = 'scoped memory for tpu_custom_call.1']
    %10 = vsyncpa [#allocation3], 0
    %11 = vsyncpa [#allocation6], 0
    %12 = vsyncpa [#allocation4], 0
    %13 = vsyncpa [#allocation10], 0
    // Predicated region
    $region2: #{tpu_custom_call.1} parent=1 // pred_check
      _
    $region3: #{tpu_custom_call.1} parent=1 // pred_check_branch
      %15 = sbr.rel (0) target = $region5
    $region4: #{tpu_custom_call.1} parent=1 // pred_region
      %17 = vsyncadd [#allocation3], 0
      %s19 = sshll.u32 %s0, 4
      %s20 = int_to_ptr.hbm [resolvable:$true] %s19
      %s21 = sshll.u32 [#allocation2], 4
      %s22 = int_to_ptr.vmem [resolvable:$true] %s21
      %24 = dma.hbm_to_vmem [thread:$0]  %s20, 128, %s22, [#allocation3]
    $region5: #{tpu_custom_call.1} parent=1 // pred_fallthru
      _
    // Predicated region
    $region6: #{tpu_custom_call.1} parent=1 // pred_check
      _
    $region7: #{tpu_custom_call.1} parent=1 // pred_check_branch
      %26 = sbr.rel (0) target = $region9
    $region8: #{tpu_custom_call.1} parent=1 // pred_region
      %28 = vsyncadd [#allocation6], 0
      %s29 = sshll.u32 %s1, 4
      %s30 = int_to_ptr.hbm [resolvable:$true] %s29
      %s31 = sshll.u32 [#allocation5], 4
      %s32 = int_to_ptr.vmem [resolvable:$true] %s31
      %37 = dma.hbm_to_vmem [thread:$0]  %s30, 1024, %s32, [#allocation6], 64, 64, 4
    $region9: #{tpu_custom_call.1} parent=1 // pred_fallthru
      _
    // Predicated region
    $region10: #{tpu_custom_call.1} parent=1 // pred_check
      _
    $region11: #{tpu_custom_call.1} parent=1 // pred_check_branch
      %39 = sbr.rel (0) target = $region13
    $region12: #{tpu_custom_call.1} parent=1 // pred_region
      %41 = vsyncadd [#allocation6], 0
      %s42 = sshll.u32 %s2, 4
      %s43 = int_to_ptr.hbm [resolvable:$true] %s42
      %s44 = sshll.u32 [#allocation7], 4
      %s45 = int_to_ptr.vmem [resolvable:$true] %s44
      %50 = dma.hbm_to_vmem [thread:$0]  %s43, 64, %s45, [#allocation6], 16, 16, 1
    $region13: #{tpu_custom_call.1} parent=1 // pred_fallthru
      _
    // Predicated region
    $region14: #{tpu_custom_call.1} parent=1 // pred_check
      _
    $region15: #{tpu_custom_call.1} parent=1 // pred_check_branch
      %52 = sbr.rel (0) target = $region17
    $region16: #{tpu_custom_call.1} parent=1 // pred_region
      %54 = dma.done [#allocation3], 128
    $region17: #{tpu_custom_call.1} parent=1 // pred_fallthru
      _
    // Predicated region
    $region18: #{tpu_custom_call.1} parent=1 // pred_check
      _
    $region19: #{tpu_custom_call.1} parent=1 // pred_check_branch
      %56 = sbr.rel (0) target = $region21
    $region20: #{tpu_custom_call.1} parent=1 // pred_region
      %58 = dma.done [#allocation6], 1024
    $region21: #{tpu_custom_call.1} parent=1 // pred_fallthru
      _
    // Predicated region
    $region22: #{tpu_custom_call.1} parent=1 // pred_check
      _
    $region23: #{tpu_custom_call.1} parent=1 // pred_check_branch
      %60 = sbr.rel (0) target = $region25
    $region24: #{tpu_custom_call.1} parent=1 // pred_region
      %62 = dma.done [#allocation6], 64
    $region25: #{tpu_custom_call.1} parent=1 // pred_fallthru
      _
    %v64 = vld [vmem:[#allocation2] sm:$0xff]
    %v65 = vld [vmem:[#allocation5] sm:$0xf]
    %v66 = vld [vmem:[#allocation5 + $0x4] sm:$0xf]
    %v67 = vld [vmem:[#allocation5 + $0x8] sm:$0xf]
    %v68 = vld [vmem:[#allocation5 + $0xc] sm:$0xf]
    %v69 = vpack.c.bf16 %v64, %v64
    %v70 = vld [vmem:[#allocation7] sm:$0x1]
    %v72 = vperm.slane %v70, 0
    %v78 = vunpack.c.l.b16 %v65
    %v79 = vunpack.c.l.b16 %v66
    %v80 = vunpack.c.l.b16 %v67
    %v81 = vunpack.c.l.b16 %v68
    %v82 = vpack.c.b16 %v79, %v78
    %v83 = vpack.c.b16 %v81, %v80
    %vm86 = vcmask 261120
    %v88 = vsel %vm86, %v69, 0
    %90 = vmatpush.bf16.msra.mxu0 0
    %91 = vmatpush.bf16.msra.mxu0 0
    %92 = vmatpush.bf16.msra.mxu0 0
    %93 = vmatpush.bf16.msra.mxu0 0
    %94 = vmatpush.bf16.msra.mxu0 0
    %95 = vmatpush.bf16.msra.mxu0 0
    %96 = vmatpush.bf16.msra.mxu0 %v83
    %97 = vmatpush.bf16.msra.mxu0 %v82
    %98 = vmatmul.bf16.gmra.mxu0 %v88
    %v99 = vpop.f32.mrf.mxu0
    %v100 = vadd.f32 %v72, %v99
    %v101 = vpop.f32.mrf.mxu0
    %102 = vdwg.mxu0
    %v103 = vmax.f32 %v100, 0.0
    %s104 = scalar_lea.vmem [#allocation5], 16
    %v105 = vld [vmem:[%s104] sm:$0xf]
    %v106 = vld [vmem:[%s104 + $0x4] sm:$0xf]
    %v107 = vld [vmem:[%s104 + $0x8] sm:$0xf]
    %v108 = vld [vmem:[%s104 + $0xc] sm:$0xf]
    %v109 = vpack.c.bf16 %v103, %v103
    %s110 = scalar_lea.vmem [#allocation7], 1
    %v111 = vld [vmem:[%s110] sm:$0x1]
    %v113 = vperm.slane %v111, 0
    %v119 = vunpack.c.l.b16 %v105
    %v120 = vunpack.c.l.b16 %v106
    %v121 = vunpack.c.l.b16 %v107
    %v122 = vunpack.c.l.b16 %v108
    %v123 = vpack.c.b16 %v120, %v119
    %v124 = vpack.c.b16 %v122, %v121
    %v128 = vsel %vm86, %v109, 0
    %130 = vmatpush.bf16.msra.mxu0 0
    %131 = vmatpush.bf16.msra.mxu0 0
    %132 = vmatpush.bf16.msra.mxu0 0
    %133 = vmatpush.bf16.msra.mxu0 0
    %134 = vmatpush.bf16.msra.mxu0 0
    %135 = vmatpush.bf16.msra.mxu0 0
    %136 = vmatpush.bf16.msra.mxu0 %v124
    %137 = vmatpush.bf16.msra.mxu0 %v123
    %138 = vmatmul.bf16.gmra.mxu0 %v128
    %v139 = vpop.f32.mrf.mxu0
    %v140 = vadd.f32 %v113, %v139
    %v141 = vpop.f32.mrf.mxu0
    %142 = vdwg.mxu0
    %v143 = vmax.f32 %v140, 0.0
    %144 = vst [vmem:[#allocation8] sm:$0xff] %v143
    %s145 = scalar_lea.vmem [#allocation5], 32
    %v146 = vld [vmem:[%s145] sm:$0xf]
    %v147 = vld [vmem:[%s145 + $0x4] sm:$0xf]
    %v148 = vld [vmem:[%s145 + $0x8] sm:$0xf]
    %v149 = vld [vmem:[%s145 + $0xc] sm:$0xf]
    %v150 = vpack.c.bf16 %v143, %v143
    %s151 = scalar_lea.vmem [#allocation7], 2
    %v152 = vld [vmem:[%s151] sm:$0x1]
    %v154 = vperm.slane %v152, 0
    %v160 = vunpack.c.l.b16 %v146
    %v161 = vunpack.c.l.b16 %v147
    %v162 = vunpack.c.l.b16 %v148
    %v163 = vunpack.c.l.b16 %v149
    %v164 = vpack.c.b16 %v161, %v160
    %v165 = vpack.c.b16 %v163, %v162
    %v169 = vsel %vm86, %v150, 0
    %171 = vmatpush.bf16.msra.mxu0 0
    %172 = vmatpush.bf16.msra.mxu0 0
    %173 = vmatpush.bf16.msra.mxu0 0
    %174 = vmatpush.bf16.msra.mxu0 0
    %175 = vmatpush.bf16.msra.mxu0 0
    %176 = vmatpush.bf16.msra.mxu0 0
    %177 = vmatpush.bf16.msra.mxu0 %v165
    %178 = vmatpush.bf16.msra.mxu0 %v164
    %179 = vmatmul.bf16.gmra.mxu0 %v169
    %v180 = vpop.f32.mrf.mxu0
    %v181 = vadd.f32 %v154, %v180
    %v182 = vpop.f32.mrf.mxu0
    %183 = vdwg.mxu0
    %v184 = vmax.f32 %v181, 0.0
    %s185 = scalar_lea.vmem [#allocation5], 48
    %v186 = vld [vmem:[%s185] sm:$0xf]
    %v187 = vld [vmem:[%s185 + $0x4] sm:$0xf]
    %v188 = vld [vmem:[%s185 + $0x8] sm:$0xf]
    %v189 = vld [vmem:[%s185 + $0xc] sm:$0xf]
    %v190 = vpack.c.bf16 %v184, %v184
    %s191 = scalar_lea.vmem [#allocation7], 3
    %v192 = vld [vmem:[%s191] sm:$0x1]
    %v194 = vperm.slane %v192, 0
    %v200 = vunpack.c.l.b16 %v186
    %v201 = vunpack.c.l.b16 %v187
    %v202 = vunpack.c.l.b16 %v188
    %v203 = vunpack.c.l.b16 %v189
    %v204 = vpack.c.b16 %v201, %v200
    %v205 = vpack.c.b16 %v203, %v202
    %v209 = vsel %vm86, %v190, 0
    %211 = vmatpush.bf16.msra.mxu0 0
    %212 = vmatpush.bf16.msra.mxu0 0
    %213 = vmatpush.bf16.msra.mxu0 0
    %214 = vmatpush.bf16.msra.mxu0 0
    %215 = vmatpush.bf16.msra.mxu0 0
    %216 = vmatpush.bf16.msra.mxu0 0
    %217 = vmatpush.bf16.msra.mxu0 %v205
    %218 = vmatpush.bf16.msra.mxu0 %v204
    %219 = vmatmul.bf16.gmra.mxu0 %v209
    %v220 = vpop.f32.mrf.mxu0
    %v221 = vadd.f32 %v194, %v220
    %v222 = vpop.f32.mrf.mxu0
    %223 = vdwg.mxu0
    %v224 = vmax.f32 %v221, 0.0
    %225 = vst [vmem:[#allocation9] sm:$0xff] %v224
    // Predicated region
    $region26: #{tpu_custom_call.1} parent=1 // pred_check
      _
    $region27: #{tpu_custom_call.1} parent=1 // pred_check_branch
      %227 = sbr.rel (0) target = $region29
    $region28: #{tpu_custom_call.1} parent=1 // pred_region
      %229 = vsyncadd [#allocation4], 0
      %s231 = sshll.u32 [#allocation8], 4
      %s232 = int_to_ptr.vmem [resolvable:$true] %s231
      %s233 = sshll.u32 %s3, 4
      %s234 = int_to_ptr.hbm [resolvable:$true] %s233
      %236 = dma.vmem_to_hbm [thread:$0]  %s232, 128, %s234, [#allocation4]
    $region29: #{tpu_custom_call.1} parent=1 // pred_fallthru
      _
    // Predicated region
    $region30: #{tpu_custom_call.1} parent=1 // pred_check
      _
    $region31: #{tpu_custom_call.1} parent=1 // pred_check_branch
      %238 = sbr.rel (0) target = $region33
    $region32: #{tpu_custom_call.1} parent=1 // pred_region
      %240 = vsyncadd [#allocation10], 0
      %s242 = sshll.u32 [#allocation9], 4
      %s243 = int_to_ptr.vmem [resolvable:$true] %s242
      %s244 = sshll.u32 %s4, 4
      %s245 = int_to_ptr.hbm [resolvable:$true] %s244
      %247 = dma.vmem_to_hbm [thread:$0]  %s243, 128, %s245, [#allocation10]
    $region33: #{tpu_custom_call.1} parent=1 // pred_fallthru
      _
    // Predicated region
    $region34: #{tpu_custom_call.1} parent=1 // pred_check
      _
    $region35: #{tpu_custom_call.1} parent=1 // pred_check_branch
      %249 = sbr.rel (0) target = $region37
    $region36: #{tpu_custom_call.1} parent=1 // pred_region
      %251 = dma.done [#allocation4], 128
    $region37: #{tpu_custom_call.1} parent=1 // pred_fallthru
      _
    // Predicated region
    $region38: #{tpu_custom_call.1} parent=1 // pred_check
      _
    $region39: #{tpu_custom_call.1} parent=1 // pred_check_branch
      %253 = sbr.rel (0) target = $region41
    $region40: #{tpu_custom_call.1} parent=1 // pred_region
      %255 = dma.done [#allocation10], 128
    $region41: #{tpu_custom_call.1} parent=1 // pred_fallthru
      _
    %256 = vsyncpa [#allocation3], 1
    %257 = vsyncpa [#allocation6], 1
    %258 = vsyncpa [#allocation4], 1
    %259 = vsyncpa [#allocation10], 1

</llo_original>
